<compile_context>
chip_gen: v5e
topology: v5e:2x2
jax: 0.10.0
libtpu: 0.0.40
codegen_flags: <defaults>
</compile_context>

<pallas_src>
import jax
import jax.numpy as jnp
from jax.experimental import pallas as pl
from jax.experimental.pallas import tpu as pltpu

EPS = 1e-5
_MiB = 1024 * 1024


# -------------------- hardware-aware sizing --------------------
def _hw_config():
    """Returns (tile_target_bytes, usable_vmem_bytes, bf16_dot_channel_min)."""
    kind = ""
    try:
        kind = jax.devices()[0].device_kind.lower()
    except Exception:
        pass
    vmem_cap = 128 * _MiB
    try:  # refine with the real per-core capacity when the query is available
        cap = getattr(pltpu.get_tpu_info(), "vmem_capacity_bytes", None)
        if cap:
            vmem_cap = int(cap)
    except Exception:
        pass
    if ("v7" in kind) or ("7x" in kind):
        vmem_cap = min(vmem_cap, 64 * _MiB)          # 64 MiB per TensorCore on v7x
    is_v5e = ("v5e" in kind) or ("v5 lite" in kind) or ("v5lite" in kind)
    if is_v5e:
        tile_target = 2 * _MiB        # ~820 GB/s: a 2 MiB tile already ~2.5 us/step
    elif vmem_cap <= 64 * _MiB:
        tile_target = 7 * _MiB        # v7x: 3.2 TB/s needs bigger tiles to amortize ~0.35 us/step
    else:
        tile_target = 4 * _MiB        # v6e-class: 1.4 TB/s, 128 MiB VMEM
    usable = max(16 * _MiB, vmem_cap - 16 * _MiB)    # ~48 MiB on v7x, ~112 MiB on v5e/v6e
    bf16_min_ch = 64 if is_v5e else 128              # v5e MXU saturates earlier in f32
    return tile_target, usable, bf16_min_ch


def _vmem_limit(need_bytes, usable):
    # 2x headroom for pipelining/internal scratch, clamped to the usable cap.
    return int(min(usable, max(8 * _MiB, 2 * need_bytes)))


def _plan_hw(hw, bytes_per_col, target_bytes):
    """Pick (hw_tile, hw_padded).  Lane-dense (multiple of 128) tiles whenever the
    tile is large; small non-aligned planes use one full-width tile; large
    non-aligned planes are zero-padded to a multiple of the tile."""
    target_rows = max(128, target_bytes // max(bytes_per_col, 1))
    if hw % 128 == 0:
        best, t, limit = 128, 128, min(hw, target_rows)
        while t <= limit:
            if hw % t == 0:
                best = t
            t += 128
        return best, hw
    if hw < 128 or hw * bytes_per_col <= target_bytes:
        return hw, hw                                 # small plane: one full-width tile
    tile = max(128, (min(target_rows, hw) // 128) * 128)
    hw_pad = ((hw + tile - 1) // tile) * tile         # zero-pad; output cols sliced off
    return tile, hw_pad


def _scale_tile(base_tile, total, bytes_per_col, target_bytes):
    """Grow a tile by an integer factor dividing total//base_tile, up to target."""
    steps = max(1, total // base_tile)
    best = 1
    for k in range(1, steps + 1):
        if steps % k == 0 and base_tile * k * bytes_per_col <= target_bytes:
            best = k
    return base_tile * best


# -------------------- Kernel 1: per-(sample, channel) sum / sum-of-squares --------------------
def _stats_kernel(x_ref, psum_ref, psq_ref):
    j = pl.program_id(1)

    @pl.when(j == 0)
    def _():
        psum_ref[...] = jnp.zeros_like(psum_ref)
        psq_ref[...] = jnp.zeros_like(psq_ref)

    x = x_ref[...].astype(jnp.float32)                      # (Cin, tile), lane-dense
    psum_ref[...] += jnp.sum(x, axis=-1, keepdims=True)     # XLU lane-reduce, (Cin, 1)
    psq_ref[...] += jnp.sum(x * x, axis=-1, keepdims=True)


def _channel_stats(x_3d, hw_tile, usable):
    """x_3d: (N, Cin, HW) -> per-sample (psum, psumsq), each (N, Cin, 1) f32."""
    n, cin, hw = x_3d.shape
    grid = (n, hw // hw_tile)
    need = 2 * cin * hw_tile * x_3d.dtype.itemsize + 8 * cin * 4 + _MiB
    # TODO(synk): on v7x with N==1 a second parallel HW-chunk axis (partials reduced
    # in the wrapper) would use both TensorCores for this pass.
    return pl.pallas_call(
        _stats_kernel,
        out_shape=(
            jax.ShapeDtypeStruct((n, cin, 1), jnp.float32),
            jax.ShapeDtypeStruct((n, cin, 1), jnp.float32),
        ),
        grid_spec=pltpu.PrefetchScalarGridSpec(
            num_scalar_prefetch=0,
            grid=grid,
            in_specs=[pl.BlockSpec((None, cin, hw_tile), lambda i, j: (i, 0, j))],
            out_specs=(
                pl.BlockSpec((None, cin, 1), lambda i, j: (i, 0, 0)),
                pl.BlockSpec((None, cin, 1), lambda i, j: (i, 0, 0)),
            ),
        ),
        compiler_params=pltpu.CompilerParams(
            dimension_semantics=("parallel", "arbitrary"),
            vmem_limit_bytes=_vmem_limit(need, usable),
        ),
    )(x_3d)


# -------------------- Kernel 2: fused BN(affine) + ReLU + 1x1 conv --------------------
def _fused_kernel(x_ref, scale_ref, shift_ref, w_ref, b_ref, o_ref):
    x = x_ref[...].astype(jnp.float32)                           # (Cin, tile)
    y = jnp.maximum(x * scale_ref[...] + shift_ref[...], 0.0)    # BN + ReLU in f32 (VPU)
    w = w_ref[...]                                               # (Cout, Cin), pre-cast in wrapper
    y = y.astype(w.dtype)                                        # bf16 only on the MXU fast path
    o = jnp.dot(w, y, preferred_element_type=jnp.float32) + b_ref[...]
    o_ref[...] = o.astype(o_ref.dtype)                           # (Cout, tile), lane-dense store


def _fused_bn_relu_conv(x_3d, scale, shift, w_oc, b_col, hw_tile, out_dtype, usable):
    n, cin, hw = x_3d.shape
    cout = w_oc.shape[0]
    grid = (n, hw // hw_tile)
    need = (2 * (cin * x_3d.dtype.itemsize + cout * jnp.dtype(out_dtype).itemsize) * hw_tile
            + 2 * cout * cin * w_oc.dtype.itemsize + _MiB)
    # TODO(synk): constant-index operands (scale/shift/w/b) could use
    # pipeline_mode=pl.Buffered(1) to halve their VMEM on v7x.
    return pl.pallas_call(
        _fused_kernel,
        out_shape=jax.ShapeDtypeStruct((n, cout, hw), out_dtype),
        grid_spec=pltpu.PrefetchScalarGridSpec(
            num_scalar_prefetch=0,
            grid=grid,
            in_specs=[
                pl.BlockSpec((None, cin, hw_tile), lambda i, j: (i, 0, j)),
                pl.BlockSpec((cin, 1), lambda i, j: (0, 0)),
                pl.BlockSpec((cin, 1), lambda i, j: (0, 0)),
                pl.BlockSpec((cout, cin), lambda i, j: (0, 0)),
                pl.BlockSpec((cout, 1), lambda i, j: (0, 0)),
            ],
            out_specs=pl.BlockSpec((None, cout, hw_tile), lambda i, j: (i, 0, j)),
        ),
        compiler_params=pltpu.CompilerParams(
            dimension_semantics=("parallel", "parallel"),
            vmem_limit_bytes=_vmem_limit(need, usable),
        ),
    )(x_3d, scale, shift, w_oc, b_col)


# -------------------- Kernel 3: single-pass (whole activation resident in VMEM) ---------------
def _single_pass_kernel(x_ref, g_ref, bt_ref, w_ref, b_ref, o_ref):
    n, cin, hw = x_ref.shape
    inv_m = 1.0 / (n * hw)
    zeros = jnp.zeros((cin, 1), jnp.float32)

    def stat_body(i, carry):
        s, sq = carry
        xi = x_ref[i].astype(jnp.float32)                        # (Cin, HW)
        return (s + jnp.sum(xi, axis=-1, keepdims=True),
                sq + jnp.sum(xi * xi, axis=-1, keepdims=True))

    s, sq = jax.lax.fori_loop(0, n, stat_body, (zeros, zeros))
    mean = s * inv_m
    var = sq * inv_m - mean * mean                               # biased variance
    invstd = jax.lax.rsqrt(var + EPS)
    scale = g_ref[...] * invstd
    shift = bt_ref[...] - mean * scale
    w = w_ref[...]
    bias = b_ref[...]

    def out_body(i, carry):
        xi = x_ref[i].astype(jnp.float32)
        y = jnp.maximum(xi * scale + shift, 0.0).astype(w.dtype)
        o = jnp.dot(w, y, preferred_element_type=jnp.float32) + bias
        o_ref[i] = o.astype(o_ref.dtype)
        return carry

    jax.lax.fori_loop(0, n, out_body, 0)


def _single_pass(x_3d, g_col, bt_col, w_oc, b_col, out_dtype, need, usable):
    n, cin, hw = x_3d.shape
    cout = w_oc.shape[0]
    return pl.pallas_call(
        _single_pass_kernel,
        out_shape=jax.ShapeDtypeStruct((n, cout, hw), out_dtype),
        grid_spec=pltpu.PrefetchScalarGridSpec(
            num_scalar_prefetch=0,
            grid=(1,),
            in_specs=[
                pl.BlockSpec((n, cin, hw), lambda i: (0, 0, 0)),
                pl.BlockSpec((cin, 1), lambda i: (0, 0)),
                pl.BlockSpec((cin, 1), lambda i: (0, 0)),
                pl.BlockSpec((cout, cin), lambda i: (0, 0)),
                pl.BlockSpec((cout, 1), lambda i: (0, 0)),
            ],
            out_specs=pl.BlockSpec((n, cout, hw), lambda i: (0, 0, 0)),
        ),
        compiler_params=pltpu.CompilerParams(
            dimension_semantics=("arbitrary",),
            vmem_limit_bytes=_vmem_limit(need, usable),
        ),
    )(x_3d, g_col, bt_col, w_oc, b_col)


# -------------------- Wrapper --------------------
def bn_residual_conv1(x_nchw, gamma, beta, conv_w, conv_b, *,
                      out_dtype=None, single_pass_max_bytes=None, tile_target_bytes=None):
    """
    x_nchw : (N, Cin, H, W) float32 or bfloat16
    gamma, beta : (Cin,)  BatchNorm2d affine parameters
    conv_w : (Cout, Cin, 1, 1)  1x1 conv weight (PyTorch layout)
    conv_b : (Cout,)
    returns (N, Cout, H, W) in `out_dtype` (defaults to x dtype)
    """
    n, cin, h, w = x_nchw.shape
    cout = conv_w.shape[0]
    hw = h * w
    out_dtype = x_nchw.dtype if out_dtype is None else jnp.dtype(out_dtype)

    tile_target, usable, bf16_min_ch = _hw_config()
    if tile_target_bytes is not None:
        tile_target = int(tile_target_bytes)

    x_3d = x_nchw.reshape(n, cin, hw)               # free view of contiguous NCHW
    w_oc = conv_w.reshape(cout, cin)
    b_col = conv_b.reshape(cout, 1).astype(jnp.float32)
    g_col = gamma.reshape(cin, 1).astype(jnp.float32)
    bt_col = beta.reshape(cin, 1).astype(jnp.float32)

    # bf16 only when the matmul is MXU-relevant; cast the weight ONCE here so the
    # kernels never re-pack the resident block per grid step.
    cast_bf16 = min(cin, cout) >= bf16_min_ch
    w_dot = w_oc.astype(jnp.bfloat16 if cast_bf16 else jnp.float32)
    # TODO(synk): the bf16 activation/weight dot trades ~1e-2-level accuracy for MXU rate.

    in_b = jnp.dtype(x_3d.dtype).itemsize
    out_b = jnp.dtype(out_dtype).itemsize

    # ---- single-pass path: whole activation resident in VMEM (one HBM read of x)
    est = (2 * (n * cin * hw * in_b + n * cout * hw * out_b)     # (double-buffered) I/O blocks
           + cin * cout * 4 + (cin + cout) * hw * 4 + 2 * _MiB)  # weight + f32 working planes
    budget = usable if single_pass_max_bytes is None else int(single_pass_max_bytes)
    if est <= budget:
        out_3d = _single_pass(x_3d, g_col, bt_col, w_dot, b_col, out_dtype, est, usable)
        return out_3d.reshape(n, cout, h, w)

    # ---- two-pass path (training-mode BN needs global stats before the ReLU)
    bytes_per_col = cin * in_b + cout * out_b
    hw_tile, hw_pad = _plan_hw(hw, bytes_per_col, tile_target)
    if hw_pad != hw:
        # zero padding leaves the sums unchanged (the divisor below uses the true H*W)
        x_3d = jnp.pad(x_3d, ((0, 0), (0, 0), (0, hw_pad - hw)))

    # pass 1: batch statistics (lane-reduced (Cin, 1) partials per sample)
    stats_tile = _scale_tile(hw_tile, hw_pad, cin * in_b, tile_target)
    psum, psq = _channel_stats(x_3d, stats_tile, usable)         # each (N, Cin, 1)
    m = float(n * hw)                                            # true element count
    s = jnp.sum(psum, axis=0)                                    # (Cin, 1)
    sq = jnp.sum(psq, axis=0)
    mean = s / m
    # TODO(synk): E[x^2]-E[x]^2 in f32 can cancel for large-mean inputs; a shifted
    # (per-channel pivot) accumulation would be more robust.
    var = sq / m - mean * mean                                   # biased variance
    invstd = jax.lax.rsqrt(var + EPS)
    scale = g_col * invstd
    shift = bt_col - mean * scale

    # pass 2: fused BN + ReLU + 1x1 conv, output produced directly in NCHW layout
    out_3d = _fused_bn_relu_conv(x_3d, scale, shift, w_dot, b_col, hw_tile, out_dtype, usable)
    if hw_pad != hw:
        out_3d = out_3d[:, :, :hw]
    return out_3d.reshape(n, cout, h, w)


# -------------------- pure-JAX reference --------------------
def _reference(x_nchw, gamma, beta, conv_w, conv_b):
    xf = x_nchw.astype(jnp.float32)
    mean = jnp.mean(xf, axis=(0, 2, 3), keepdims=True)
    var = jnp.mean((xf - mean) ** 2, axis=(0, 2, 3), keepdims=True)
    xn = (xf - mean) * jax.lax.rsqrt(var + EPS)
    xn = xn * gamma.reshape(1, -1, 1, 1) + beta.reshape(1, -1, 1, 1)
    xr = jnp.maximum(xn, 0.0)
    y = jnp.einsum("nchw,oc->nohw", xr, conv_w.reshape(conv_w.shape[0], conv_w.shape[1]))
    return y + conv_b.reshape(1, -1, 1, 1)


if __name__ == "__main__":
    key = jax.random.PRNGKey(0)
    k_x, k_g, k_b, k_w, k_cb = jax.random.split(key, 5)

    N, CIN, H, W = 2, 4, 16, 16
    COUT = 8

    x = jax.random.normal(k_x, (N, CIN, H, W), dtype=jnp.float32)
    gamma = 1.0 + 0.1 * jax.random.normal(k_g, (CIN,), dtype=jnp.float32)
    beta = 0.1 * jax.random.normal(k_b, (CIN,), dtype=jnp.float32)
    conv_w = 0.2 * jax.random.normal(k_w, (COUT, CIN, 1, 1), dtype=jnp.float32)
    conv_b = 0.1 * jax.random.normal(k_cb, (COUT,), dtype=jnp.float32)

    ref = _reference(x, gamma, beta, conv_w, conv_b)

    # 1) default dispatch: small activation -> single-pass (VMEM-resident) kernel
    out_sp = jax.block_until_ready(bn_residual_conv1(x, gamma, beta, conv_w, conv_b))
    assert out_sp.shape == (N, COUT, H, W), out_sp.shape
    assert jnp.allclose(out_sp, ref, atol=1e-4, rtol=1e-4), float(jnp.max(jnp.abs(out_sp - ref)))

    # 2) forced two-pass (tiled) path on the same inputs
    out_tp = jax.block_until_ready(
        bn_residual_conv1(x, gamma, beta, conv_w, conv_b, single_pass_max_bytes=0))
    assert jnp.allclose(out_tp, ref, atol=1e-4, rtol=1e-4), float(jnp.max(jnp.abs(out_tp - ref)))

    # 3) two-pass with non-128-aligned H*W (small plane -> full-width tile)
    H2, W2 = 12, 10
    x2 = jax.random.normal(k_x, (N, CIN, H2, W2), dtype=jnp.float32)
    ref2 = _reference(x2, gamma, beta, conv_w, conv_b)
    out2 = jax.block_until_ready(
        bn_residual_conv1(x2, gamma, beta, conv_w, conv_b, single_pass_max_bytes=0))
    assert jnp.allclose(out2, ref2, atol=1e-4, rtol=1e-4), float(jnp.max(jnp.abs(out2 - ref2)))

    # 4) two-pass with non-128-aligned H*W and a tiny tile target -> zero-pad path
    H3, W3 = 10, 20
    x3 = jax.random.normal(k_x, (N, CIN, H3, W3), dtype=jnp.float32)
    ref3 = _reference(x3, gamma, beta, conv_w, conv_b)
    out3 = jax.block_until_ready(
        bn_residual_conv1(x3, gamma, beta, conv_w, conv_b,
                          single_pass_max_bytes=0, tile_target_bytes=1024))
    assert jnp.allclose(out3, ref3, atol=1e-4, rtol=1e-4), float(jnp.max(jnp.abs(out3 - ref3)))

    print("KERNEL_OK")
</pallas_src>

<mosaic_0001>
module attributes {stable_mosaic.version = 11 : i64} {
  func.func @_single_pass_kernel(%arg0: i32, %arg1: memref<2x4x256xf32, #tpu.memory_space<vmem>>, %arg2: memref<4x1xf32, #tpu.memory_space<vmem>>, %arg3: memref<4x1xf32, #tpu.memory_space<vmem>>, %arg4: memref<8x4xf32, #tpu.memory_space<vmem>>, %arg5: memref<8x1xf32, #tpu.memory_space<vmem>>, %arg6: memref<2x8x256xf32, #tpu.memory_space<vmem>>) attributes {dimension_semantics = [#tpu.dimension_semantics<arbitrary>], iteration_bounds = array<i64: 1>, scalar_prefetch = 0 : i64, scratch_operands = 0 : i64, tpu.core_type = #tpu.core_type<tc>, window_params = [{pipeline_mode = #tpu.pipeline_mode<synchronous>, transform_indices = @transform_0, window_bounds = array<i64: 2, 4, 256>}, {pipeline_mode = #tpu.pipeline_mode<synchronous>, transform_indices = @transform_1, window_bounds = array<i64: 4, 1>}, {pipeline_mode = #tpu.pipeline_mode<synchronous>, transform_indices = @transform_2, window_bounds = array<i64: 4, 1>}, {pipeline_mode = #tpu.pipeline_mode<synchronous>, transform_indices = @transform_3, window_bounds = array<i64: 8, 4>}, {pipeline_mode = #tpu.pipeline_mode<synchronous>, transform_indices = @transform_4, window_bounds = array<i64: 8, 1>}, {pipeline_mode = #tpu.pipeline_mode<synchronous>, transform_indices = @transform_5, window_bounds = array<i64: 2, 8, 256>}]} {
    %cst = arith.constant 0.000000e+00 : f32
    %0 = vector.broadcast %cst : f32 to vector<4x1xf32>
    %c0_i32 = arith.constant 0 : i32
    %c2_i32 = arith.constant 2 : i32
    %1 = arith.addi %c0_i32, %c2_i32 : i32
    %c1_i32 = arith.constant 1 : i32
    %2:2 = scf.for %arg7 = %c0_i32 to %1 step %c1_i32 iter_args(%arg8 = %0, %arg9 = %0) -> (vector<4x1xf32>, vector<4x1xf32>)  : i32 {
      %20 = arith.index_cast %arg7 : i32 to index
      %c0_15 = arith.constant 0 : index
      %c0_16 = arith.constant 0 : index
      %21 = vector.load %arg1[%20, %c0_15, %c0_16] : memref<2x4x256xf32, #tpu.memory_space<vmem>>, vector<1x4x256xf32>
      %22 = vector.shape_cast %21 : vector<1x4x256xf32> to vector<4x256xf32>
      %cst_17 = arith.constant dense<0.000000e+00> : vector<4xf32>
      %23 = vector.multi_reduction <add>, %22, %cst_17 [1] : vector<4x256xf32> to vector<4xf32>
      %24 = vector.shape_cast %23 : vector<4xf32> to vector<4x1xf32>
      %25 = arith.addf %arg8, %24 : vector<4x1xf32>
      %26 = arith.mulf %22, %22 : vector<4x256xf32>
      %cst_18 = arith.constant dense<0.000000e+00> : vector<4xf32>
      %27 = vector.multi_reduction <add>, %26, %cst_18 [1] : vector<4x256xf32> to vector<4xf32>
      %28 = vector.shape_cast %27 : vector<4xf32> to vector<4x1xf32>
      %29 = arith.addf %arg9, %28 : vector<4x1xf32>
      scf.yield %25, %29 : vector<4x1xf32>, vector<4x1xf32>
    }
    %c2_i32_0 = arith.constant 2 : i32
    %cst_1 = arith.constant 0.001953125 : f32
    %3 = vector.broadcast %cst_1 : f32 to vector<4x1xf32>
    %4 = arith.mulf %2#0, %3 : vector<4x1xf32>
    %cst_2 = arith.constant 0.001953125 : f32
    %5 = vector.broadcast %cst_2 : f32 to vector<4x1xf32>
    %6 = arith.mulf %2#1, %5 : vector<4x1xf32>
    %7 = arith.mulf %4, %4 : vector<4x1xf32>
    %8 = arith.subf %6, %7 : vector<4x1xf32>
    %cst_3 = arith.constant 9.99999974E-6 : f32
    %9 = vector.broadcast %cst_3 : f32 to vector<4x1xf32>
    %10 = arith.addf %8, %9 : vector<4x1xf32>
    %11 = math.rsqrt %10 : vector<4x1xf32>
    %c0 = arith.constant 0 : index
    %c0_4 = arith.constant 0 : index
    %12 = vector.load %arg2[%c0, %c0_4] : memref<4x1xf32, #tpu.memory_space<vmem>>, vector<4x1xf32>
    %13 = arith.mulf %12, %11 : vector<4x1xf32>
    %c0_5 = arith.constant 0 : index
    %c0_6 = arith.constant 0 : index
    %14 = vector.load %arg3[%c0_5, %c0_6] : memref<4x1xf32, #tpu.memory_space<vmem>>, vector<4x1xf32>
    %15 = arith.mulf %4, %13 : vector<4x1xf32>
    %16 = arith.subf %14, %15 : vector<4x1xf32>
    %c0_7 = arith.constant 0 : index
    %c0_8 = arith.constant 0 : index
    %17 = vector.load %arg4[%c0_7, %c0_8] : memref<8x4xf32, #tpu.memory_space<vmem>>, vector<8x4xf32>
    %c0_9 = arith.constant 0 : index
    %c0_10 = arith.constant 0 : index
    %18 = vector.load %arg5[%c0_9, %c0_10] : memref<8x1xf32, #tpu.memory_space<vmem>>, vector<8x1xf32>
    %c0_i32_11 = arith.constant 0 : i32
    %c2_i32_12 = arith.constant 2 : i32
    %19 = arith.addi %c0_i32_11, %c2_i32_12 : i32
    %c1_i32_13 = arith.constant 1 : i32
    scf.for %arg7 = %c0_i32_11 to %19 step %c1_i32_13  : i32 {
      %20 = arith.index_cast %arg7 : i32 to index
      %c0_15 = arith.constant 0 : index
      %c0_16 = arith.constant 0 : index
      %21 = vector.load %arg1[%20, %c0_15, %c0_16] : memref<2x4x256xf32, #tpu.memory_space<vmem>>, vector<1x4x256xf32>
      %22 = vector.shape_cast %21 : vector<1x4x256xf32> to vector<4x256xf32>
      %23 = vector.broadcast %13 : vector<4x1xf32> to vector<4x256xf32>
      %24 = arith.mulf %22, %23 : vector<4x256xf32>
      %25 = vector.broadcast %16 : vector<4x1xf32> to vector<4x256xf32>
      %26 = arith.addf %24, %25 : vector<4x256xf32>
      %cst_17 = arith.constant 0.000000e+00 : f32
      %27 = vector.broadcast %cst_17 : f32 to vector<4x256xf32>
      %28 = arith.maximumf %26, %27 : vector<4x256xf32>
      %cst_18 = arith.constant dense<0.000000e+00> : vector<8x256xf32>
      %29 = tpu.matmul %17, %28, %cst_18 {dimension_numbers = #tpu.dot_dimension_numbers<[1], [0], [0], [1], [0, 0, 1, 1], [], []>} : vector<8x4xf32>, vector<4x256xf32>, vector<8x256xf32> -> vector<8x256xf32>
      %30 = vector.broadcast %18 : vector<8x1xf32> to vector<8x256xf32>
      %31 = arith.addf %29, %30 : vector<8x256xf32>
      %32 = arith.index_cast %arg7 : i32 to index
      %c0_19 = arith.constant 0 : index
      %c0_20 = arith.constant 0 : index
      %33 = vector.load %arg6[%32, %c0_19, %c0_20] : memref<2x8x256xf32, #tpu.memory_space<vmem>>, vector<1x8x256xf32>
      %34 = vector.shape_cast %33 : vector<1x8x256xf32> to vector<8x256xf32>
      %35 = vector.shape_cast %31 : vector<8x256xf32> to vector<1x8x256xf32>
      tpu.vector_store %arg6[%32, %c0_19, %c0_20], %35 {strides = array<i32>} : memref<2x8x256xf32, #tpu.memory_space<vmem>>, vector<1x8x256xf32>,
    }
    %c2_i32_14 = arith.constant 2 : i32
    return
  }
  func.func @transform_0(%arg0: i32) -> (i32, i32, i32) {
    %c0_i32 = arith.constant 0 : i32
    %c0_i32_0 = arith.constant 0 : i32
    %c0_i32_1 = arith.constant 0 : i32
    %c0_i32_2 = arith.constant 0 : i32
    return %c0_i32, %c0_i32_0, %c0_i32_1 : i32, i32, i32
  }
  func.func @transform_1(%arg0: i32) -> (i32, i32) {
    %c0_i32 = arith.constant 0 : i32
    %c0_i32_0 = arith.constant 0 : i32
    %c0_i32_1 = arith.constant 0 : i32
    return %c0_i32, %c0_i32_0 : i32, i32
  }
  func.func @transform_2(%arg0: i32) -> (i32, i32) {
    %c0_i32 = arith.constant 0 : i32
    %c0_i32_0 = arith.constant 0 : i32
    %c0_i32_1 = arith.constant 0 : i32
    return %c0_i32, %c0_i32_0 : i32, i32
  }
  func.func @transform_3(%arg0: i32) -> (i32, i32) {
    %c0_i32 = arith.constant 0 : i32
    %c0_i32_0 = arith.constant 0 : i32
    %c0_i32_1 = arith.constant 0 : i32
    return %c0_i32, %c0_i32_0 : i32, i32
  }
  func.func @transform_4(%arg0: i32) -> (i32, i32) {
    %c0_i32 = arith.constant 0 : i32
    %c0_i32_0 = arith.constant 0 : i32
    %c0_i32_1 = arith.constant 0 : i32
    return %c0_i32, %c0_i32_0 : i32, i32
  }
  func.func @transform_5(%arg0: i32) -> (i32, i32, i32) {
    %c0_i32 = arith.constant 0 : i32
    %c0_i32_0 = arith.constant 0 : i32
    %c0_i32_1 = arith.constant 0 : i32
    %c0_i32_2 = arith.constant 0 : i32
    return %c0_i32, %c0_i32_0, %c0_i32_1 : i32, i32, i32
  }
}

</mosaic_0001>

<llo_original>
// kernel: tpu_custom_call.1
$region0: #{tpu_custom_call.1}
  #allocation0 [shape = 'u32[]', space=smem, size = 0x4, offset = 0x4, fixed_abs, tag = 'smem constant byte address 0x4 - core index']
  #allocation1 [shape = 'u32[72,128]{1,0:T(1,128)}', space=vmem, size = 0x9000, scoped, tag = 'internal scratch']
  %s0 = inlined_call_operand.vmem [shape: f32[2,4,256], index: 0, kind: input, shape index: {}]
  %s1 = inlined_call_operand.vmem [shape: f32[4,1], index: 1, kind: input, shape index: {}]
  %s2 = inlined_call_operand.vmem [shape: f32[4,1], index: 2, kind: input, shape index: {}]
  %s3 = inlined_call_operand.vmem [shape: f32[8,4], index: 3, kind: input, shape index: {}]
  %s4 = inlined_call_operand.vmem [shape: f32[8,1], index: 4, kind: input, shape index: {}]
  %s5 = inlined_call_operand.hbm [shape: f32[2,8,256], index: 5, kind: output, shape index: {}]
  %s6 = sld [smem:[#allocation0]]
  $region44: #{tpu_custom_call.1} parent=0
    _
  %s8 = ssub.s32 1, %s6
  %s9 = scalar_select 0, %s8, %s6
  $region1: #{tpu_custom_call.1} parent=0
    #allocation2 [shape = 'u8[16384]{0}', space=vmem, size = 0x4000, scoped, tag = 'output window, operand 0, single buffered']
    #allocation3 [shape = 's32[1]{0}', space=sflag, size = 0x4, scoped, tag = 'scoped memory for tpu_custom_call.1']
    %10 = vsyncpa [#allocation3], 0
    // Predicated region
    $region2: #{tpu_custom_call.1} parent=1 // pred_check
      _
    $region3: #{tpu_custom_call.1} parent=1 // pred_check_branch
      %12 = sbr.rel (0) target = $region5
    $region4: #{tpu_custom_call.1} parent=1 // pred_region
      _
    $region5: #{tpu_custom_call.1} parent=1 // pred_fallthru
      _
    // Predicated region
    $region6: #{tpu_custom_call.1} parent=1 // pred_check
      _
    $region7: #{tpu_custom_call.1} parent=1 // pred_check_branch
      %14 = sbr.rel (0) target = $region9
    $region8: #{tpu_custom_call.1} parent=1 // pred_region
      _
    $region9: #{tpu_custom_call.1} parent=1 // pred_fallthru
      _
    // Predicated region
    $region10: #{tpu_custom_call.1} parent=1 // pred_check
      _
    $region11: #{tpu_custom_call.1} parent=1 // pred_check_branch
      %16 = sbr.rel (0) target = $region13
    $region12: #{tpu_custom_call.1} parent=1 // pred_region
      _
    $region13: #{tpu_custom_call.1} parent=1 // pred_fallthru
      _
    // Predicated region
    $region14: #{tpu_custom_call.1} parent=1 // pred_check
      _
    $region15: #{tpu_custom_call.1} parent=1 // pred_check_branch
      %18 = sbr.rel (0) target = $region17
    $region16: #{tpu_custom_call.1} parent=1 // pred_region
      _
    $region17: #{tpu_custom_call.1} parent=1 // pred_fallthru
      _
    // Predicated region
    $region18: #{tpu_custom_call.1} parent=1 // pred_check
      _
    $region19: #{tpu_custom_call.1} parent=1 // pred_check_branch
      %20 = sbr.rel (0) target = $region21
    $region20: #{tpu_custom_call.1} parent=1 // pred_region
      _
    $region21: #{tpu_custom_call.1} parent=1 // pred_fallthru
      _
    loop: start=0, step=1, limit=2
    $region22: #{tpu_custom_call.1} parent=1 // loop_pre_header
      _
    $region23: #{tpu_custom_call.1} parent=1 // loop_header
      %s22 = sphi 0, %s26
      %p23 = scmp.ge.s32.totalorder %s22, 2
      %v27 = vphi 0.0, %v45
      %v28 = vphi 0.0, %v58
    $region24: #{tpu_custom_call.1} parent=1 // loop_header_branch
      %25 = sbr.rel (%p23) target = $region28
    $region25: #{tpu_custom_call.1} parent=1 // loop_body
      %s29 = smul.u32 %s22, 2
      %s30 = smul.addr %s29, 4
      %s31 = scalar_lea.vmem %s0, %s30
      %v32 = vld [vmem:[%s31] sm:$0xff]
      %34 = vst [vmem:[#allocation1] ss:$2 sm:$0xff] %v32
      %v35 = vld.sshfl [vmem:[#allocation1] sm:$0xff pattern:$0x75316420]
      %v36 = vld.sshfl [vmem:[#allocation1 + $0x8] sm:$0xff pattern:$0x75316420]
      %vm39 = vcmask 1043456
      %v40 = vsel %vm39, %v35, 0.0
      %v41 = vsel %vm39, %v36, 0.0
      %v42 = vadd.f32 %v40, %v41
      %43 = vadd.xlane.f32.xlu0 %v42
      %v44 = vpop.xlane.xlu0 %43
      %v45 = vadd.f32 %v27, %v44
      %v46 = vmul.f32 %v32, %v32
      %48 = vst [vmem:[#allocation1] ss:$2 sm:$0xff] %v46
      %v49 = vld.sshfl [vmem:[#allocation1] sm:$0xff pattern:$0x75316420]
      %v50 = vld.sshfl [vmem:[#allocation1 + $0x8] sm:$0xff pattern:$0x75316420]
      %v53 = vsel %vm39, %v49, 0.0
      %v54 = vsel %vm39, %v50, 0.0
      %v55 = vadd.f32 %v53, %v54
      %56 = vadd.xlane.f32.xlu0 %v55
      %v57 = vpop.xlane.xlu0 %56
      %v58 = vadd.f32 %v28, %v57
    $region26: #{tpu_custom_call.1} parent=1 // loop_footer
      %s26 = sadd.s32 1, %s22
    $region27: #{tpu_custom_call.1} parent=1 // loop_footer_branch
      %21 = sbr.rel target = $region23
    $region28: #{tpu_custom_call.1} parent=1 // loop_exit
      _
    %v59 = vmul.f32 %v27, 0.001953125
    %v60 = vmul.f32 %v28, 0.001953125
    %v61 = vmul.f32 %v59, %v59
    %v62 = vsub.f32 %v60, %v61
    %v63 = vadd.f32 %v62, 1e-05
    %v64 = vrsqrt.pop %v63
    %v65 = vmul.f32 %v64, %v63
    %v66 = vmul.f32 %v65, %v64
    %v67 = vmul.f32 0.5, %v66
    %v68 = vsub.f32 1.5, %v67
    %v69 = vmul.f32 %v64, %v68
    %vm70 = vweird.f32 %v63
    %vm71 = vweird.f32 %v64
    %vm72 = vmor %vm70, %vm71
    %v73 = vsel %vm72, %v64, %v69
    %v74 = vld [vmem:[%s1] sm:$0xf]
    %v75 = vmul.f32 %v74, %v73
    %v76 = vld [vmem:[%s2] sm:$0xf]
    %v77 = vmul.f32 %v59, %v75
    %v78 = vsub.f32 %v76, %v77
    %v79 = vld [vmem:[%s3] sm:$0xff]
    %v80 = vld [vmem:[%s4] sm:$0xff]
    loop: start=0, step=1, limit=2
    $region29: #{tpu_custom_call.1} parent=1 // loop_pre_header
      _
    $region30: #{tpu_custom_call.1} parent=1 // loop_header
      %s82 = sphi 0, %s86
      %p83 = scmp.ge.s32.totalorder %s82, 2
    $region31: #{tpu_custom_call.1} parent=1 // loop_header_branch
      %85 = sbr.rel (%p83) target = $region35
    $region32: #{tpu_custom_call.1} parent=1 // loop_body
      %s87 = smul.u32 %s82, 2
      %s88 = smul.addr %s87, 4
      %s89 = scalar_lea.vmem %s0, %s88
      %v90 = vld [vmem:[%s89] sm:$0xff]
      %92 = vset.pattern.permute.xlu0 0
      %93 = vperm.xlu0 %92, %v75
      %v94 = vpop.permute.xlu0 %93
      %v96 = vunpack.c.l.s4 839922192
      %v97 = vunpack.c.0.s8 %v96
      %v98 = vperm.slane %v94, %v97
      %v100 = vmul.f32 %v90, %v98
      %102 = vset.pattern.permute.xlu0 0
      %103 = vperm.xlu0 %102, %v78
      %v104 = vpop.permute.xlu0 %103
      %v106 = vunpack.c.l.s4 839922192
      %v107 = vunpack.c.0.s8 %v106
      %v108 = vperm.slane %v104, %v107
      %v110 = vadd.f32 %v100, %v108
      %v111 = vmax.f32 %v110, 0.0
      %113 = vset.pattern.permute.xlu0 0
      %114 = vperm.xlu0 %113, %v80
      %v115 = vpop.permute.xlu0 %114
      %118 = vst [vmem:[#allocation1] ss:$2 sm:$0xff] %v111
      %v119 = vld.sshfl [vmem:[#allocation1] sm:$0xff pattern:$0x75316420]
      %v120 = vld.sshfl [vmem:[#allocation1 + $0x8] sm:$0xff pattern:$0x75316420]
      %vm121 = vcmask 31744
      %v123 = vsel %vm121, %v79, 0
      %vm125 = vcmask 1043456
      %v126 = vsel %vm125, %v119, 0
      %v128 = vsel %vm125, %v120, 0
      %130 = vmatpush.msra.mxu0 0.0
      %131 = vmatpush.msra.mxu0 0.0
      %132 = vmatpush.msra.mxu0 0.0
      %133 = vmatpush.msra.mxu0 0.0
      %134 = vmatpush.msra.mxu0 0.0
      %135 = vmatpush.msra.mxu0 0.0
      %136 = vmatpush.msra.mxu0 0.0
      %137 = vmatpush.msra.mxu0 0.0
      %138 = vmatpush.msra.mxu0 0.0
      %139 = vmatpush.msra.mxu0 0.0
      %140 = vmatpush.msra.mxu0 0.0
      %141 = vmatpush.msra.mxu0 0.0
      %142 = vmatpush.msra.mxu0 0.0
      %143 = vmatpush.msra.mxu0 0.0
      %144 = vmatpush.msra.mxu0 0.0
      %145 = vmatpush.msra.mxu0 %v126
      %146 = vmatmul.f32.gmra.mxu0 %v123
      %v147 = vpop.f32.mrf.mxu0
      %v148 = vadd.f32 %v115, %v147
      %149 = vdwg.mxu0
      %150 = vmatpush.msra.mxu0 0.0
      %151 = vmatpush.msra.mxu0 0.0
      %152 = vmatpush.msra.mxu0 0.0
      %153 = vmatpush.msra.mxu0 0.0
      %154 = vmatpush.msra.mxu0 0.0
      %155 = vmatpush.msra.mxu0 0.0
      %156 = vmatpush.msra.mxu0 0.0
      %157 = vmatpush.msra.mxu0 0.0
      %158 = vmatpush.msra.mxu0 0.0
      %159 = vmatpush.msra.mxu0 0.0
      %160 = vmatpush.msra.mxu0 0.0
      %161 = vmatpush.msra.mxu0 0.0
      %162 = vmatpush.msra.mxu0 0.0
      %163 = vmatpush.msra.mxu0 0.0
      %164 = vmatpush.msra.mxu0 0.0
      %165 = vmatpush.msra.mxu0 %v128
      %166 = vmatmul.f32.gmra.mxu0 %v123
      %v167 = vpop.f32.mrf.mxu0
      %v168 = vadd.f32 %v115, %v167
      %169 = vdwg.mxu0
      %s170 = smul.addr %s87, 8
      %s171 = scalar_lea.vmem [#allocation2], %s170
      %172 = vst [vmem:[%s171] sm:$0xff] %v148
      %173 = vst [vmem:[%s171 + $0x8] sm:$0xff] %v168
    $region33: #{tpu_custom_call.1} parent=1 // loop_footer
      %s86 = sadd.s32 1, %s82
    $region34: #{tpu_custom_call.1} parent=1 // loop_footer_branch
      %81 = sbr.rel target = $region30
    $region35: #{tpu_custom_call.1} parent=1 // loop_exit
      _
    // Predicated region
    $region36: #{tpu_custom_call.1} parent=1 // pred_check
      _
    $region37: #{tpu_custom_call.1} parent=1 // pred_check_branch
      %175 = sbr.rel (0) target = $region39
    $region38: #{tpu_custom_call.1} parent=1 // pred_region
      %177 = vsyncadd [#allocation3], 0
      %s178 = sshll.u32 [#allocation2], 4
      %s179 = int_to_ptr.vmem [resolvable:$true] %s178
      %s180 = sshll.u32 %s5, 4
      %s181 = int_to_ptr.hbm [resolvable:$true] %s180
      %186 = dma.vmem_to_hbm [thread:$0]  %s179, 512, %s181, [#allocation3], 256, 256, 16
    $region39: #{tpu_custom_call.1} parent=1 // pred_fallthru
      _
    // Predicated region
    $region40: #{tpu_custom_call.1} parent=1 // pred_check
      _
    $region41: #{tpu_custom_call.1} parent=1 // pred_check_branch
      %188 = sbr.rel (0) target = $region43
    $region42: #{tpu_custom_call.1} parent=1 // pred_region
      %190 = dma.done [#allocation3], 512
    $region43: #{tpu_custom_call.1} parent=1 // pred_fallthru
      _
    %191 = vsyncpa [#allocation3], 1

</llo_original>
